<compile_context>
chip_gen: v7x
topology: tpu7x:2x2x1
jax: 0.10.0
libtpu: 0.0.40
codegen_flags: <defaults>
</compile_context>

<pallas_src>
import math
import jax
import jax.numpy as jnp
from jax.experimental import pallas as pl
from jax.experimental.pallas import tpu as pltpu


def _round_up(n, m):
    return ((n + m - 1) // m) * m


def generator_kernel(x_ref, w1_ref, b1_ref, w2_ref, b2_ref, o_ref):
    # x_ref : (1, Bt)    lane-dense batch tile
    # w1_ref: (32, 1)    layer-1 weight column (PyTorch layout)
    # b1_ref: (32, 1)
    # w2_ref: (4, 32)    layer-2 weight (PyTorch layout)
    # b2_ref: (4, 1)
    # o_ref : (4, Bt)    lane-dense output tile
    x = x_ref[...]                                            # (1, Bt)

    # Layer 1: (32,1) @ (1,Bt) outer product on the MXU (vex slot has huge
    # slack); keeps the VALU budget for the activation / bias adds.
    h = jnp.dot(w1_ref[...], x,
                preferred_element_type=jnp.float32) + b1_ref[...]   # (32, Bt)
    # LeakyReLU(0.02): mul + max = 2 VALU ops per vreg.
    h = jnp.maximum(h, 0.02 * h)

    # Layer 2: (4,32) @ (32,Bt) on the MXU, f32 accumulate, lane-dense result.
    y = jnp.dot(w2_ref[...], h,
                preferred_element_type=jnp.float32) + b2_ref[...]   # (4, Bt)

    # Exact, numerically stable sigmoid: single EUP tanh, tiny (4,Bt) slab.
    o_ref[...] = 0.5 * (jnp.tanh(0.5 * y) + 1.0)


def _pick_tile(B, block_b):
    """Batch-tile size (lanes): multiple of 128, capped by block_b, and kept
    small enough that the parallel grid axis has >= 2 steps when possible
    (megacore sharding on v7x)."""
    b128 = _round_up(B, 128)
    if b128 >= 256:
        bt = min(block_b, _round_up(-(-b128 // 2), 128))
    else:
        bt = b128                      # single 128-lane tile
    steps = -(-b128 // bt)
    return bt, steps * bt


def generator_forward_lane_major(x, w1, b1, w2, b2, *, block_b=128 * 1024):
    """Core kernel call.  Returns a lane-dense (4, B_pad) f32 slab (batch is
    the lane axis, zero-padded to the tile size).  Consumers that can work in
    this layout avoid an extra full-HBM transpose pass."""
    B = x.shape[0]
    H = w1.shape[0]          # 32
    O = w2.shape[0]          # 4

    bt, b_pad = _pick_tile(B, block_b)

    # (B,1) -> (1,B) is a reshape (no transpose HLO); pad only if needed.
    x_t = x.astype(jnp.float32).reshape(1, B)
    if b_pad != B:
        x_t = jnp.pad(x_t, ((0, 0), (0, b_pad - B)))

    b1c = b1.reshape(H, 1).astype(jnp.float32)
    b2c = b2.reshape(O, 1).astype(jnp.float32)

    out_t = pl.pallas_call(
        generator_kernel,
        out_shape=jax.ShapeDtypeStruct((O, b_pad), jnp.float32),
        grid_spec=pltpu.PrefetchScalarGridSpec(
            num_scalar_prefetch=0,
            grid=(b_pad // bt,),
            in_specs=[
                # x: tiled along the batch (lane) axis.
                pl.BlockSpec((1, bt), lambda i: (0, i)),
                # Weights/biases: constant block index -> DMA'd once, stay
                # resident in VMEM across the whole batch grid.
                pl.BlockSpec((H, 1), lambda i: (0, 0)),
                pl.BlockSpec((H, 1), lambda i: (0, 0)),
                pl.BlockSpec((O, H), lambda i: (0, 0)),
                pl.BlockSpec((O, 1), lambda i: (0, 0)),
            ],
            out_specs=pl.BlockSpec((O, bt), lambda i: (0, i)),
        ),
        compiler_params=pltpu.CompilerParams(
            # Batch tiles are independent: shard across TensorCores on v7x.
            dimension_semantics=("parallel",),
            # ~200*bt bytes in flight at bt=128K (~26 MB); 48 MiB leaves
            # headroom and still fits v7x's 64 MiB physical VMEM.
            vmem_limit_bytes=48 * 1024 * 1024,
        ),
    )(x_t, w1.astype(jnp.float32), b1c, w2.astype(jnp.float32), b2c)
    return out_t


def generator_forward(x, w1, b1, w2, b2, *, block_b=128 * 1024):
    """PyTorch-facing forward pass.

    Args:
      x : (B, 1) float32 input (latent seed), as in the PyTorch module.
      w1: (32, 1), b1: (32,)   -- nn.Linear(1, 32) params (PyTorch layout).
      w2: (4, 32), b2: (4,)    -- nn.Linear(32, 4) params (PyTorch layout).
    Returns:
      (B, 4) float32 output.
    """
    B = x.shape[0]
    out_t = generator_forward_lane_major(x, w1, b1, w2, b2, block_b=block_b)
    # Back to the PyTorch-facing (B, 4) layout; drop batch padding.  If the
    # consumer can use the (4, B) lane-major slab directly, prefer
    # generator_forward_lane_major to skip this extra HBM pass.
    return out_t[:, :B].T


def init_params(key):
    # PyTorch nn.Linear default init: U(-1/sqrt(fan_in), 1/sqrt(fan_in)).
    k1, k2, k3, k4 = jax.random.split(key, 4)
    bound1 = 1.0 / math.sqrt(1.0)    # fan_in = 1
    bound2 = 1.0 / math.sqrt(32.0)   # fan_in = 32
    w1 = jax.random.uniform(k1, (32, 1), jnp.float32, -bound1, bound1)
    b1 = jax.random.uniform(k2, (32,), jnp.float32, -bound1, bound1)
    w2 = jax.random.uniform(k3, (4, 32), jnp.float32, -bound2, bound2)
    b2 = jax.random.uniform(k4, (4,), jnp.float32, -bound2, bound2)
    return w1, b1, w2, b2


if __name__ == "__main__":
    key = jax.random.PRNGKey(0)
    pkey, xkey = jax.random.split(key)
    w1, b1, w2, b2 = init_params(pkey)

    # Generator input: random seed vector of shape (batch, 1).
    B = 8
    x = jax.random.uniform(xkey, (B, 1), jnp.float32)

    out = generator_forward(x, w1, b1, w2, b2)
    out = jax.block_until_ready(out)

    # Reference check in plain JAX (PyTorch semantics: y = x @ W.T + b).
    h_ref = x @ w1.T + b1
    h_ref = jnp.where(h_ref > 0, h_ref, 0.02 * h_ref)
    y_ref = jax.nn.sigmoid(h_ref @ w2.T + b2)

    assert out.shape == (B, 4)
    assert jnp.allclose(out, y_ref, atol=1e-5), "mismatch vs reference"

    print("KERNEL_OK")
</pallas_src>

<mosaic_0001>
module attributes {stable_mosaic.version = 11 : i64} {
  func.func @generator_kernel(%arg0: i32, %arg1: memref<1x128xf32, #tpu.memory_space<vmem>>, %arg2: memref<32x1xf32, #tpu.memory_space<vmem>>, %arg3: memref<32x1xf32, #tpu.memory_space<vmem>>, %arg4: memref<4x32xf32, #tpu.memory_space<vmem>>, %arg5: memref<4x1xf32, #tpu.memory_space<vmem>>, %arg6: memref<4x128xf32, #tpu.memory_space<vmem>>) attributes {dimension_semantics = [#tpu.dimension_semantics<parallel>], iteration_bounds = array<i64: 1>, scalar_prefetch = 0 : i64, scratch_operands = 0 : i64, tpu.core_type = #tpu.core_type<tc>, window_params = [{transform_indices = @transform_0, window_bounds = array<i64: 1, 128>}, {pipeline_mode = #tpu.pipeline_mode<synchronous>, transform_indices = @transform_1, window_bounds = array<i64: 32, 1>}, {pipeline_mode = #tpu.pipeline_mode<synchronous>, transform_indices = @transform_2, window_bounds = array<i64: 32, 1>}, {pipeline_mode = #tpu.pipeline_mode<synchronous>, transform_indices = @transform_3, window_bounds = array<i64: 4, 32>}, {pipeline_mode = #tpu.pipeline_mode<synchronous>, transform_indices = @transform_4, window_bounds = array<i64: 4, 1>}, {transform_indices = @transform_5, window_bounds = array<i64: 4, 128>}]} {
    %c0 = arith.constant 0 : index
    %c0_0 = arith.constant 0 : index
    %0 = vector.load %arg1[%c0, %c0_0] : memref<1x128xf32, #tpu.memory_space<vmem>>, vector<1x128xf32>
    %c0_1 = arith.constant 0 : index
    %c0_2 = arith.constant 0 : index
    %1 = vector.load %arg2[%c0_1, %c0_2] : memref<32x1xf32, #tpu.memory_space<vmem>>, vector<32x1xf32>
    %cst = arith.constant dense<0.000000e+00> : vector<32x128xf32>
    %2 = tpu.matmul %1, %0, %cst {dimension_numbers = #tpu.dot_dimension_numbers<[1], [0], [0], [1], [0, 0, 1, 1], [], []>} : vector<32x1xf32>, vector<1x128xf32>, vector<32x128xf32> -> vector<32x128xf32>
    %c0_3 = arith.constant 0 : index
    %c0_4 = arith.constant 0 : index
    %3 = vector.load %arg3[%c0_3, %c0_4] : memref<32x1xf32, #tpu.memory_space<vmem>>, vector<32x1xf32>
    %4 = vector.broadcast %3 : vector<32x1xf32> to vector<32x128xf32>
    %5 = arith.addf %2, %4 : vector<32x128xf32>
    %cst_5 = arith.constant 2.000000e-02 : f32
    %6 = vector.broadcast %cst_5 : f32 to vector<32x128xf32>
    %7 = arith.mulf %6, %5 : vector<32x128xf32>
    %8 = arith.maximumf %5, %7 : vector<32x128xf32>
    %c0_6 = arith.constant 0 : index
    %c0_7 = arith.constant 0 : index
    %9 = vector.load %arg4[%c0_6, %c0_7] : memref<4x32xf32, #tpu.memory_space<vmem>>, vector<4x32xf32>
    %cst_8 = arith.constant dense<0.000000e+00> : vector<4x128xf32>
    %10 = tpu.matmul %9, %8, %cst_8 {dimension_numbers = #tpu.dot_dimension_numbers<[1], [0], [0], [1], [0, 0, 1, 1], [], []>} : vector<4x32xf32>, vector<32x128xf32>, vector<4x128xf32> -> vector<4x128xf32>
    %c0_9 = arith.constant 0 : index
    %c0_10 = arith.constant 0 : index
    %11 = vector.load %arg5[%c0_9, %c0_10] : memref<4x1xf32, #tpu.memory_space<vmem>>, vector<4x1xf32>
    %12 = vector.broadcast %11 : vector<4x1xf32> to vector<4x128xf32>
    %13 = arith.addf %10, %12 : vector<4x128xf32>
    %cst_11 = arith.constant 5.000000e-01 : f32
    %14 = vector.broadcast %cst_11 : f32 to vector<4x128xf32>
    %15 = arith.mulf %14, %13 : vector<4x128xf32>
    %16 = math.tanh %15 : vector<4x128xf32>
    %cst_12 = arith.constant 1.000000e+00 : f32
    %17 = vector.broadcast %cst_12 : f32 to vector<4x128xf32>
    %18 = arith.addf %16, %17 : vector<4x128xf32>
    %cst_13 = arith.constant 5.000000e-01 : f32
    %19 = vector.broadcast %cst_13 : f32 to vector<4x128xf32>
    %20 = arith.mulf %19, %18 : vector<4x128xf32>
    %c0_14 = arith.constant 0 : index
    %c0_15 = arith.constant 0 : index
    %21 = vector.load %arg6[%c0_14, %c0_15] : memref<4x128xf32, #tpu.memory_space<vmem>>, vector<4x128xf32>
    tpu.vector_store %arg6[%c0_14, %c0_15], %20 {strides = array<i32>} : memref<4x128xf32, #tpu.memory_space<vmem>>, vector<4x128xf32>,
    return
  }
  func.func @transform_0(%arg0: i32) -> (i32, i32) {
    %c0_i32 = arith.constant 0 : i32
    %c0_i32_0 = arith.constant 0 : i32
    return %c0_i32, %arg0 : i32, i32
  }
  func.func @transform_1(%arg0: i32) -> (i32, i32) {
    %c0_i32 = arith.constant 0 : i32
    %c0_i32_0 = arith.constant 0 : i32
    %c0_i32_1 = arith.constant 0 : i32
    return %c0_i32, %c0_i32_0 : i32, i32
  }
  func.func @transform_2(%arg0: i32) -> (i32, i32) {
    %c0_i32 = arith.constant 0 : i32
    %c0_i32_0 = arith.constant 0 : i32
    %c0_i32_1 = arith.constant 0 : i32
    return %c0_i32, %c0_i32_0 : i32, i32
  }
  func.func @transform_3(%arg0: i32) -> (i32, i32) {
    %c0_i32 = arith.constant 0 : i32
    %c0_i32_0 = arith.constant 0 : i32
    %c0_i32_1 = arith.constant 0 : i32
    return %c0_i32, %c0_i32_0 : i32, i32
  }
  func.func @transform_4(%arg0: i32) -> (i32, i32) {
    %c0_i32 = arith.constant 0 : i32
    %c0_i32_0 = arith.constant 0 : i32
    %c0_i32_1 = arith.constant 0 : i32
    return %c0_i32, %c0_i32_0 : i32, i32
  }
  func.func @transform_5(%arg0: i32) -> (i32, i32) {
    %c0_i32 = arith.constant 0 : i32
    %c0_i32_0 = arith.constant 0 : i32
    return %c0_i32, %arg0 : i32, i32
  }
}

</mosaic_0001>

<llo_original>
// kernel: tpu_custom_call.1
$region0: #{tpu_custom_call.1}
  #allocation0 [shape = 'u32[]', space=smem, size = 0x4, offset = 0x4, fixed_abs, tag = 'smem constant byte address 0x4 - core index']
  #allocation1 [shape = 'u32[144,128]{1,0:T(1,128)}', space=vmem, size = 0x12000, scoped, tag = 'internal scratch']
  %s0 = inlined_call_operand.vmem [shape: f32[1,128], index: 0, kind: input, shape index: {}]
  %s1 = inlined_call_operand.vmem [shape: f32[32,1], index: 1, kind: input, shape index: {}]
  %s2 = inlined_call_operand.vmem [shape: f32[32,1], index: 2, kind: input, shape index: {}]
  %s3 = inlined_call_operand.vmem [shape: f32[4,32], index: 3, kind: input, shape index: {}]
  %s4 = inlined_call_operand.vmem [shape: f32[4,1], index: 4, kind: input, shape index: {}]
  %s5 = inlined_call_operand.hbm [shape: f32[4,128], index: 5, kind: output, shape index: {}]
  %s6 = sld [smem:[#allocation0]]
  $region30: #{tpu_custom_call.1} parent=0
    _
  %s8 = ssub.s32 1, %s6
  %s9 = scalar_select 0, %s8, %s6
  $region1: #{tpu_custom_call.1} parent=0
    #allocation2 [shape = 'u8[2048]{0}', space=vmem, size = 0x800, scoped, tag = 'output window, operand 0, single buffered']
    #allocation3 [shape = 's32[1]{0}', space=sflag, size = 0x4, scoped, tag = 'scoped memory for tpu_custom_call.1']
    %10 = vsyncpa [#allocation3], 0
    // Predicated region
    $region2: #{tpu_custom_call.1} parent=1 // pred_check
      _
    $region3: #{tpu_custom_call.1} parent=1 // pred_check_branch
      %12 = sbr.rel (0) target = $region5
    $region4: #{tpu_custom_call.1} parent=1 // pred_region
      _
    $region5: #{tpu_custom_call.1} parent=1 // pred_fallthru
      _
    // Predicated region
    $region6: #{tpu_custom_call.1} parent=1 // pred_check
      _
    $region7: #{tpu_custom_call.1} parent=1 // pred_check_branch
      %14 = sbr.rel (0) target = $region9
    $region8: #{tpu_custom_call.1} parent=1 // pred_region
      _
    $region9: #{tpu_custom_call.1} parent=1 // pred_fallthru
      _
    // Predicated region
    $region10: #{tpu_custom_call.1} parent=1 // pred_check
      _
    $region11: #{tpu_custom_call.1} parent=1 // pred_check_branch
      %16 = sbr.rel (0) target = $region13
    $region12: #{tpu_custom_call.1} parent=1 // pred_region
      _
    $region13: #{tpu_custom_call.1} parent=1 // pred_fallthru
      _
    // Predicated region
    $region14: #{tpu_custom_call.1} parent=1 // pred_check
      _
    $region15: #{tpu_custom_call.1} parent=1 // pred_check_branch
      %18 = sbr.rel (0) target = $region17
    $region16: #{tpu_custom_call.1} parent=1 // pred_region
      _
    $region17: #{tpu_custom_call.1} parent=1 // pred_fallthru
      _
    // Predicated region
    $region18: #{tpu_custom_call.1} parent=1 // pred_check
      _
    $region19: #{tpu_custom_call.1} parent=1 // pred_check_branch
      %20 = sbr.rel (0) target = $region21
    $region20: #{tpu_custom_call.1} parent=1 // pred_region
      _
    $region21: #{tpu_custom_call.1} parent=1 // pred_fallthru
      _
    %v21 = vld [vmem:[%s0] sm:$0x1]
    %v22 = vld [vmem:[%s1] sm:$0xff]
    %v23 = vld [vmem:[%s1 + $0x8] sm:$0xff]
    %v24 = vld [vmem:[%s1 + $0x10] sm:$0xff]
    %v25 = vld [vmem:[%s1 + $0x18] sm:$0xff]
    %v26 = vld [vmem:[%s2] sm:$0xff]
    %v27 = vld [vmem:[%s2 + $0x8] sm:$0xff]
    %v28 = vld [vmem:[%s2 + $0x10] sm:$0xff]
    %v29 = vld [vmem:[%s2 + $0x18] sm:$0xff]
    %31 = vset.pattern.permute.xlu0 0
    %32 = vperm.xlu0 %31, %v26
    %v33 = vpop.permute.xlu0 %32
    %36 = vset.pattern.permute.xlu0 0
    %37 = vperm.xlu0 %36, %v27
    %v38 = vpop.permute.xlu0 %37
    %41 = vset.pattern.permute.xlu0 0
    %42 = vperm.xlu0 %41, %v28
    %v43 = vpop.permute.xlu0 %42
    %46 = vset.pattern.permute.xlu0 0
    %47 = vperm.xlu0 %46, %v29
    %v48 = vpop.permute.xlu0 %47
    %vm50 = vcmask 7168
    %v52 = vsel %vm50, %v22, 0
    %v55 = vsel %vm50, %v23, 0
    %v58 = vsel %vm50, %v24, 0
    %v61 = vsel %vm50, %v25, 0
    %vm63 = vcmask 1040384
    %v65 = vsel %vm63, %v21, 0
    %67 = vmatprep.subr.mxu0 0.0
    %68 = vmatpush1.msra.mxu0 %v65
    %69 = vmatprep.subr.mxu0 0.0
    %70 = vmatpush1.msra.mxu0 0.0
    %71 = vmatprep.subr.mxu0 0.0
    %72 = vmatpush1.msra.mxu0 0.0
    %73 = vmatprep.subr.mxu0 0.0
    %74 = vmatpush1.msra.mxu0 0.0
    %75 = vmatprep.subr.mxu0 0.0
    %76 = vmatpush1.msra.mxu0 0.0
    %77 = vmatprep.subr.mxu0 0.0
    %78 = vmatpush1.msra.mxu0 0.0
    %79 = vmatprep.subr.mxu0 0.0
    %80 = vmatpush1.msra.mxu0 0.0
    %81 = vmatprep.subr.mxu0 0.0
    %82 = vmatpush1.msra.mxu0 0.0
    %83 = vmatprep.subr.mxu0 0.0
    %84 = vmatpush1.msra.mxu0 0.0
    %85 = vmatprep.subr.mxu0 0.0
    %86 = vmatpush1.msra.mxu0 0.0
    %87 = vmatprep.subr.mxu0 0.0
    %88 = vmatpush1.msra.mxu0 0.0
    %89 = vmatprep.subr.mxu0 0.0
    %90 = vmatpush1.msra.mxu0 0.0
    %91 = vmatprep.subr.mxu0 0.0
    %92 = vmatpush1.msra.mxu0 0.0
    %93 = vmatprep.subr.mxu0 0.0
    %94 = vmatpush1.msra.mxu0 0.0
    %95 = vmatprep.subr.mxu0 0.0
    %96 = vmatpush1.msra.mxu0 0.0
    %97 = vmatprep.subr.mxu0 0.0
    %98 = vmatpush1.msra.mxu0 0.0
    %99 = vmatprep.subr.mxu0 0.0
    %100 = vmatpush1.msra.mxu0 0.0
    %101 = vmatprep.subr.mxu0 0.0
    %102 = vmatpush1.msra.mxu0 0.0
    %103 = vmatprep.subr.mxu0 0.0
    %104 = vmatpush1.msra.mxu0 0.0
    %105 = vmatprep.subr.mxu0 0.0
    %106 = vmatpush1.msra.mxu0 0.0
    %107 = vmatprep.subr.mxu0 0.0
    %108 = vmatpush1.msra.mxu0 0.0
    %109 = vmatprep.subr.mxu0 0.0
    %110 = vmatpush1.msra.mxu0 0.0
    %111 = vmatprep.subr.mxu0 0.0
    %112 = vmatpush1.msra.mxu0 0.0
    %113 = vmatprep.subr.mxu0 0.0
    %114 = vmatpush1.msra.mxu0 0.0
    %115 = vmatprep.subr.mxu0 0.0
    %116 = vmatpush1.msra.mxu0 0.0
    %117 = vmatprep.subr.mxu0 0.0
    %118 = vmatpush1.msra.mxu0 0.0
    %119 = vmatprep.subr.mxu0 0.0
    %120 = vmatpush1.msra.mxu0 0.0
    %121 = vmatprep.subr.mxu0 0.0
    %122 = vmatpush1.msra.mxu0 0.0
    %123 = vmatprep.subr.mxu0 0.0
    %124 = vmatpush1.msra.mxu0 0.0
    %125 = vmatprep.subr.mxu0 0.0
    %126 = vmatpush1.msra.mxu0 0.0
    %127 = vmatprep.subr.mxu0 0.0
    %128 = vmatpush1.msra.mxu0 0.0
    %129 = vmatprep.subr.mxu0 0.0
    %130 = vmatpush1.msra.mxu0 0.0
    %131 = vmatprep.mubr.f32.mxu0 0.0
    %132 = vmatmul.mubr.f32.gmra.mrb[0].mxu0 %v52
    %v133 = vpop.f32.mrb[0].mxu0
    %v134 = vadd.f32 %v33, %v133
    %v135 = vpop.f32.mrb[0].mxu0
    %136 = vmatprep.mubr.f32.mxu0 0.0
    %137 = vmatmul.mubr.f32.gmra.mrb[0].mxu0 %v55
    %v138 = vpop.f32.mrb[0].mxu0
    %v139 = vadd.f32 %v38, %v138
    %v140 = vpop.f32.mrb[0].mxu0
    %141 = vmatprep.mubr.f32.mxu0 0.0
    %142 = vmatmul.mubr.f32.gmra.mrb[0].mxu0 %v58
    %v143 = vpop.f32.mrb[0].mxu0
    %v144 = vadd.f32 %v43, %v143
    %v145 = vpop.f32.mrb[0].mxu0
    %146 = vmatprep.mubr.f32.mxu0 0.0
    %147 = vmatmul.mubr.f32.gmra.mrb[0].mxu0 %v61
    %v148 = vpop.f32.mrb[0].mxu0
    %v149 = vadd.f32 %v48, %v148
    %v150 = vpop.f32.mrb[0].mxu0
    %151 = vdwg.mxu0
    %v152 = vmul.f32 %v134, 0.02
    %v153 = vmul.f32 %v139, 0.02
    %v154 = vmul.f32 %v144, 0.02
    %v155 = vmul.f32 %v149, 0.02
    %v156 = vmax.f32 %v134, %v152
    %v157 = vmax.f32 %v139, %v153
    %v158 = vmax.f32 %v144, %v154
    %v159 = vmax.f32 %v149, %v155
    %v160 = vld [vmem:[%s3] sm:$0xf]
    %v161 = vld [vmem:[%s4] sm:$0xf]
    %163 = vset.pattern.permute.xlu0 0
    %164 = vperm.xlu0 %163, %v161
    %v165 = vpop.permute.xlu0 %164
    %vm167 = vcmask 261120
    %v169 = vsel %vm167, %v160, 0
    %171 = vmatprep.subr.mxu0 0.0
    %172 = vmatpush1.msra.mxu0 %v156
    %173 = vmatprep.subr.mxu0 0.0
    %174 = vmatpush1.msra.mxu0 %v157
    %175 = vmatprep.subr.mxu0 0.0
    %176 = vmatpush1.msra.mxu0 %v158
    %177 = vmatprep.subr.mxu0 0.0
    %178 = vmatpush1.msra.mxu0 %v159
    %179 = vmatprep.subr.mxu0 0.0
    %180 = vmatpush1.msra.mxu0 0.0
    %181 = vmatprep.subr.mxu0 0.0
    %182 = vmatpush1.msra.mxu0 0.0
    %183 = vmatprep.subr.mxu0 0.0
    %184 = vmatpush1.msra.mxu0 0.0
    %185 = vmatprep.subr.mxu0 0.0
    %186 = vmatpush1.msra.mxu0 0.0
    %187 = vmatprep.subr.mxu0 0.0
    %188 = vmatpush1.msra.mxu0 0.0
    %189 = vmatprep.subr.mxu0 0.0
    %190 = vmatpush1.msra.mxu0 0.0
    %191 = vmatprep.subr.mxu0 0.0
    %192 = vmatpush1.msra.mxu0 0.0
    %193 = vmatprep.subr.mxu0 0.0
    %194 = vmatpush1.msra.mxu0 0.0
    %195 = vmatprep.subr.mxu0 0.0
    %196 = vmatpush1.msra.mxu0 0.0
    %197 = vmatprep.subr.mxu0 0.0
    %198 = vmatpush1.msra.mxu0 0.0
    %199 = vmatprep.subr.mxu0 0.0
    %200 = vmatpush1.msra.mxu0 0.0
    %201 = vmatprep.subr.mxu0 0.0
    %202 = vmatpush1.msra.mxu0 0.0
    %203 = vmatprep.subr.mxu0 0.0
    %204 = vmatpush1.msra.mxu0 0.0
    %205 = vmatprep.subr.mxu0 0.0
    %206 = vmatpush1.msra.mxu0 0.0
    %207 = vmatprep.subr.mxu0 0.0
    %208 = vmatpush1.msra.mxu0 0.0
    %209 = vmatprep.subr.mxu0 0.0
    %210 = vmatpush1.msra.mxu0 0.0
    %211 = vmatprep.subr.mxu0 0.0
    %212 = vmatpush1.msra.mxu0 0.0
    %213 = vmatprep.subr.mxu0 0.0
    %214 = vmatpush1.msra.mxu0 0.0
    %215 = vmatprep.subr.mxu0 0.0
    %216 = vmatpush1.msra.mxu0 0.0
    %217 = vmatprep.subr.mxu0 0.0
    %218 = vmatpush1.msra.mxu0 0.0
    %219 = vmatprep.subr.mxu0 0.0
    %220 = vmatpush1.msra.mxu0 0.0
    %221 = vmatprep.subr.mxu0 0.0
    %222 = vmatpush1.msra.mxu0 0.0
    %223 = vmatprep.subr.mxu0 0.0
    %224 = vmatpush1.msra.mxu0 0.0
    %225 = vmatprep.subr.mxu0 0.0
    %226 = vmatpush1.msra.mxu0 0.0
    %227 = vmatprep.subr.mxu0 0.0
    %228 = vmatpush1.msra.mxu0 0.0
    %229 = vmatprep.subr.mxu0 0.0
    %230 = vmatpush1.msra.mxu0 0.0
    %231 = vmatprep.subr.mxu0 0.0
    %232 = vmatpush1.msra.mxu0 0.0
    %233 = vmatprep.subr.mxu0 0.0
    %234 = vmatpush1.msra.mxu0 0.0
    %235 = vmatprep.mubr.f32.mxu0 0.0
    %236 = vmatmul.mubr.f32.gmra.mrb[0].mxu0 %v169
    %v237 = vpop.f32.mrb[0].mxu0
    %v238 = vadd.f32 %v165, %v237
    %v239 = vpop.f32.mrb[0].mxu0
    %240 = vdwg.mxu0
    %v241 = vmul.f32 %v238, 0.5
    %v242 = vtanh.pop %v241
    %v243 = vadd.f32 %v242, 1.0
    %v244 = vmul.f32 %v243, 0.5
    %245 = vst [vmem:[#allocation2] sm:$0xf] %v244
    // Predicated region
    $region22: #{tpu_custom_call.1} parent=1 // pred_check
      _
    $region23: #{tpu_custom_call.1} parent=1 // pred_check_branch
      %247 = sbr.rel (0) target = $region25
    $region24: #{tpu_custom_call.1} parent=1 // pred_region
      %s249 = ssub.s32 64, 64
      %250 = vsyncadd [#allocation3], %s249
      %s252 = sshll.u32 [#allocation2], 4
      %s253 = int_to_ptr.vmem [resolvable:$true] %s252
      %255 = dma.vmem_to_hbm [thread:$0]  %s253, 64, %s5, [#allocation3]
    $region25: #{tpu_custom_call.1} parent=1 // pred_fallthru
      _
    // Predicated region
    $region26: #{tpu_custom_call.1} parent=1 // pred_check
      _
    $region27: #{tpu_custom_call.1} parent=1 // pred_check_branch
      %257 = sbr.rel (0) target = $region29
    $region28: #{tpu_custom_call.1} parent=1 // pred_region
      %258 = dma.done [#allocation3], 64
    $region29: #{tpu_custom_call.1} parent=1 // pred_fallthru
      _
    %259 = vsyncpa [#allocation3], 1

</llo_original>
